<compile_context>
chip_gen: v5e
topology: v5e:2x2
jax: 0.10.0
libtpu: 0.0.40
codegen_flags: <defaults>
</compile_context>

<pallas_src>
import functools

import jax
import jax.numpy as jnp
import numpy as np
from jax.experimental import pallas as pl
from jax.experimental.pallas import tpu as pltpu


def _round_up(x, m):
    return ((x + m - 1) // m) * m


def _vmem_capacity_bytes():
    """Per-core VMEM capacity; conservative (v7x) fallback if unavailable."""
    try:
        return int(pltpu.get_tpu_info().vmem_capacity_bytes)
    except Exception:
        return 64 * 1024 * 1024


# --------------------------------------------------------------------------
# Stage 1: image encoder  I_e_partial = flatten(image) @ W_img
#   grid = (row blocks ["parallel"], K blocks ["arbitrary"])
# --------------------------------------------------------------------------
def img_encoder_kernel(img_ref, wimg_ref, out_ref, acc_ref):
    k = pl.program_id(1)

    @pl.when(k == 0)
    def _():
        acc_ref[...] = jnp.zeros_like(acc_ref)

    acc_ref[...] += jnp.dot(img_ref[...], wimg_ref[...],
                            preferred_element_type=jnp.float32)

    @pl.when(k == pl.num_programs(1) - 1)
    def _():
        out_ref[...] = acc_ref[...]


# --------------------------------------------------------------------------
# Stage 2: text projection + logits + symmetric cross entropy (single shot)
# --------------------------------------------------------------------------
def clip_loss_kernel(ie_ref, bimg_ref, pooled_ref, wtxt_ref, btxt_ref,
                     temp_ref, out_ref, *, nvalid):
    I_e = ie_ref[...] + bimg_ref[...]                         # (Bp, Dp) f32

    # text projection: bf16 operands, f32 MXU accumulation
    T_e = jnp.dot(pooled_ref[...], wtxt_ref[...],
                  preferred_element_type=jnp.float32) + btxt_ref[...]

    # temperature applied to the (B, D) side (cheaper than the (B, B) logits)
    scale = jnp.exp(temp_ref[0, 0])
    I_s = (I_e * scale).astype(jnp.bfloat16)
    T_b = T_e.astype(jnp.bfloat16)

    # rhs contracting dim = 1  ==> transposed-RHS MXU form (no XLU transpose)
    logits = jax.lax.dot_general(
        I_s, T_b, (((1,), (1,)), ((), ())),
        preferred_element_type=jnp.float32)                   # (Bp, Bp) f32

    Bp = logits.shape[0]
    ri = jax.lax.broadcasted_iota(jnp.int32, (Bp, 1), 0)      # (B, 1)
    ci = jax.lax.broadcasted_iota(jnp.int32, (1, Bp), 1)      # (1, B)
    rv = ri < nvalid                                          # valid rows
    cv = ci < nvalid                                          # valid cols
    valid = jnp.logical_and(rv, cv)
    is_diag = ri == ci

    neg = jnp.float32(-1e30)
    lg = jnp.where(valid, logits, neg)

    # diagonal / trace term computed once, reused for both CE directions
    trace = jnp.sum(jnp.where(jnp.logical_and(is_diag, valid), lg, 0.0),
                    keepdims=True)                            # (1, 1)

    # one full BxB exp pass (row-stabilized); column logsumexp reuses it
    m_r = jnp.max(lg, axis=1, keepdims=True)                  # (B, 1)
    p = jnp.exp(lg - m_r)                                     # (B, B)
    lse_r = m_r + jnp.log(jnp.sum(p, axis=1, keepdims=True))  # (B, 1)

    M = jnp.max(m_r, keepdims=True)                           # (1, 1)
    w = jnp.exp(m_r - M)                                      # (B, 1)
    col_sum = jnp.sum(p * w, axis=0, keepdims=True)           # (1, B)
    lse_c = M + jnp.log(col_sum)                              # (1, B)

    sum_lse_r = jnp.sum(jnp.where(rv, lse_r, 0.0), keepdims=True)
    sum_lse_c = jnp.sum(jnp.where(cv, lse_c, 0.0), keepdims=True)

    # 1/(2*nvalid) folded into a constant multiply (no VPU divide)
    out_ref[...] = (sum_lse_r + sum_lse_c - 2.0 * trace) * (0.5 / nvalid)


def clip_forward(image, text, params, mask=None, *, tk=None, tb=None):
    """image: (B, C, H, W) f32; text: (B, L, Htxt) f32; mask: (B, L) or None."""
    B = image.shape[0]
    L = text.shape[1]
    Htxt = text.shape[2]
    D = params["W_img"].shape[1]
    F = int(np.prod(image.shape[1:]))

    img_flat = image.reshape(B, F).astype(jnp.float32)
    text = text.astype(jnp.float32)
    if mask is None:
        mask = jnp.ones((B, L), dtype=jnp.float32)
    mask = mask.astype(jnp.float32)

    # ---- text-encoder front-end hoisted to the wrapper (tiny, f32) ----
    denom = jnp.maximum(jnp.sum(mask, axis=1, keepdims=True), 1.0)
    pooled = jnp.einsum("bl,blh->bh", mask, text) / denom        # (B, Htxt) f32

    # ---- per-generation tile size / VMEM limit ----
    vmem_cap = _vmem_capacity_bytes()
    if vmem_cap >= 96 * 1024 * 1024:          # v5e / v6e: 128 MiB physical VMEM
        tk_default, vmem_limit = 1024, 100 * 1024 * 1024
    else:                                     # v7x: 64 MiB per TensorCore
        tk_default, vmem_limit = 512, 48 * 1024 * 1024
    if tk is None:
        tk = tk_default

    # ---- padding: lane/sublane dense, B rounded for bf16 (16, 128) packing ----
    B_pad = _round_up(B, 16)
    if tb is None:
        tb = min(B_pad, 128)                  # row tile (multiple of 16)
    B_pad = _round_up(B_pad, tb)
    nb = B_pad // tb

    D_pad = _round_up(D, 128)
    H_pad = _round_up(Htxt, 128)
    tk = _round_up(min(tk, _round_up(F, 128)), 128)   # K tile: multiple of 128
    F_pad = _round_up(F, tk)
    nk = F_pad // tk

    # zero padding contributes nothing to the matmuls; padded batch rows/cols
    # are masked out of the loss inside the kernel.
    img_p = jnp.pad(img_flat, ((0, B_pad - B), (0, F_pad - F))).astype(jnp.bfloat16)
    wimg_p = jnp.pad(params["W_img"],
                     ((0, F_pad - F), (0, D_pad - D))).astype(jnp.bfloat16)
    bimg_p = jnp.pad(params["b_img"], ((0, 0), (0, D_pad - D))).astype(jnp.float32)
    pooled_p = jnp.pad(pooled,
                       ((0, B_pad - B), (0, H_pad - Htxt))).astype(jnp.bfloat16)
    wtxt_p = jnp.pad(params["W_txt"],
                     ((0, H_pad - Htxt), (0, D_pad - D))).astype(jnp.bfloat16)
    btxt_p = jnp.pad(params["b_txt"], ((0, 0), (0, D_pad - D))).astype(jnp.float32)
    temp = params["temperature"].astype(jnp.float32)              # (1, 1)

    # ---- stage 1: K-tiled, row-parallel image projection ----
    i_e = pl.pallas_call(
        img_encoder_kernel,
        out_shape=jax.ShapeDtypeStruct((B_pad, D_pad), jnp.float32),
        grid=(nb, nk),
        in_specs=[
            pl.BlockSpec((tb, tk), lambda b, k: (b, k)),          # image block
            pl.BlockSpec((tk, D_pad), lambda b, k: (k, 0)),       # W_img block
        ],
        out_specs=pl.BlockSpec((tb, D_pad), lambda b, k: (b, 0)),
        scratch_shapes=[pltpu.VMEM((tb, D_pad), jnp.float32)],    # f32 accum
        compiler_params=pltpu.CompilerParams(
            dimension_semantics=("parallel", "arbitrary"),        # rows | K-red
            vmem_limit_bytes=vmem_limit),
    )(img_p, wimg_p)

    # ---- stage 2: text projection + contrastive loss (runs once) ----
    kernel = functools.partial(clip_loss_kernel, nvalid=B)
    out = pl.pallas_call(
        kernel,
        out_shape=jax.ShapeDtypeStruct((1, 1), jnp.float32),
        in_specs=[
            pl.BlockSpec(memory_space=pltpu.MemorySpace.VMEM),    # I_e
            pl.BlockSpec(memory_space=pltpu.MemorySpace.VMEM),    # b_img
            pl.BlockSpec(memory_space=pltpu.MemorySpace.VMEM),    # pooled text
            pl.BlockSpec(memory_space=pltpu.MemorySpace.VMEM),    # W_txt
            pl.BlockSpec(memory_space=pltpu.MemorySpace.VMEM),    # b_txt
            pl.BlockSpec(memory_space=pltpu.MemorySpace.SMEM),    # temperature
        ],
        out_specs=pl.BlockSpec(memory_space=pltpu.MemorySpace.VMEM),
        compiler_params=pltpu.CompilerParams(vmem_limit_bytes=vmem_limit),
    )(i_e, bimg_p, pooled_p, wtxt_p, btxt_p, temp)
    return out[0, 0]


def clip_reference(image, text, params, mask=None):
    """Pure-JAX reference of the same forward (same bf16 matmul precision)."""
    B = image.shape[0]
    L = text.shape[1]
    img_flat = image.reshape(B, -1).astype(jnp.float32)
    if mask is None:
        mask = jnp.ones((B, L), dtype=jnp.float32)
    I_e = jnp.dot(img_flat.astype(jnp.bfloat16),
                  params["W_img"].astype(jnp.bfloat16),
                  preferred_element_type=jnp.float32) + params["b_img"]
    denom = jnp.maximum(jnp.sum(mask, axis=1, keepdims=True), 1.0)
    pooled = jnp.sum(text * mask[:, :, None], axis=1) / denom
    T_e = jnp.dot(pooled.astype(jnp.bfloat16),
                  params["W_txt"].astype(jnp.bfloat16),
                  preferred_element_type=jnp.float32) + params["b_txt"]
    scale = jnp.exp(params["temperature"][0, 0])
    logits = jnp.dot((I_e * scale).astype(jnp.bfloat16),
                     T_e.astype(jnp.bfloat16).T,
                     preferred_element_type=jnp.float32)

    def ce(lg):  # cross_entropy(lg, arange(B)) with mean reduction
        lse = jax.scipy.special.logsumexp(lg, axis=1)
        return jnp.mean(lse - jnp.diagonal(lg))

    return (ce(logits.T) + ce(logits)) / 2.0


if __name__ == "__main__":
    # Small shapes consistent with the module's forward.
    B, C, H, W = 2, 4, 16, 16      # image (NCHW)
    L, Htxt = 8, 32                # text sequence / feature dim
    D = 32                         # shared embedding dim

    key = jax.random.PRNGKey(0)
    k_img, k_txt, k_wi, k_wt, k_bi, k_bt = jax.random.split(key, 6)

    image = jax.random.normal(k_img, (B, C, H, W), dtype=jnp.float32)
    text = jax.random.normal(k_txt, (B, L, Htxt), dtype=jnp.float32)
    mask = jnp.array([[1.0] * L, [1.0] * (L - 2) + [0.0] * 2], dtype=jnp.float32)

    params = {
        "W_img": 0.02 * jax.random.normal(k_wi, (C * H * W, D), dtype=jnp.float32),
        "b_img": 0.02 * jax.random.normal(k_bi, (1, D), dtype=jnp.float32),
        "W_txt": 0.02 * jax.random.normal(k_wt, (Htxt, D), dtype=jnp.float32),
        "b_txt": 0.02 * jax.random.normal(k_bt, (1, D), dtype=jnp.float32),
        # nn.Parameter(torch.ones([]) * np.log(1/0.07))
        "temperature": jnp.full((1, 1), np.log(1.0 / 0.07), dtype=jnp.float32),
    }

    loss = clip_forward(image, text, params, mask=mask)
    loss = jax.block_until_ready(loss)

    ref = clip_reference(image, text, params, mask=mask)
    assert np.allclose(np.asarray(loss), np.asarray(ref), atol=5e-3, rtol=5e-3), (
        float(loss), float(ref))

    print("KERNEL_OK")
</pallas_src>

<mosaic_0001>
module attributes {stable_mosaic.version = 11 : i64} {
  func.func @img_encoder_kernel(%arg0: i32, %arg1: i32, %arg2: memref<16x512xbf16, #tpu.memory_space<vmem>>, %arg3: memref<512x128xbf16, #tpu.memory_space<vmem>>, %arg4: memref<16x128xf32, #tpu.memory_space<vmem>>, %arg5: memref<16x128xf32, #tpu.memory_space<vmem>>) attributes {dimension_semantics = [#tpu.dimension_semantics<parallel>, #tpu.dimension_semantics<arbitrary>], iteration_bounds = array<i64: 1, 2>, scalar_prefetch = 0 : i64, scratch_operands = 1 : i64, tpu.core_type = #tpu.core_type<tc>, window_params = [{transform_indices = @transform_0, window_bounds = array<i64: 16, 512>}, {transform_indices = @transform_1, window_bounds = array<i64: 512, 128>}, {transform_indices = @transform_2, window_bounds = array<i64: 16, 128>}]} {
    %c0_i32 = arith.constant 0 : i32
    %0 = arith.cmpi eq, %arg1, %c0_i32 : i32
    %1 = arith.extui %0 : i1 to i32
    %c0_i32_0 = arith.constant 0 : i32
    %2 = arith.cmpi ne, %1, %c0_i32_0 : i32
    scf.if %2 {
      %cst_9 = arith.constant 0.000000e+00 : f32
      %12 = vector.broadcast %cst_9 : f32 to vector<16x128xf32>
      %c0_10 = arith.constant 0 : index
      %c0_11 = arith.constant 0 : index
      %13 = vector.load %arg5[%c0_10, %c0_11] : memref<16x128xf32, #tpu.memory_space<vmem>>, vector<16x128xf32>
      tpu.vector_store %arg5[%c0_10, %c0_11], %12 {strides = array<i32>} : memref<16x128xf32, #tpu.memory_space<vmem>>, vector<16x128xf32>,
    } else {
    }
    %c0 = arith.constant 0 : index
    %c0_1 = arith.constant 0 : index
    %3 = vector.load %arg5[%c0, %c0_1] : memref<16x128xf32, #tpu.memory_space<vmem>>, vector<16x128xf32>
    %c0_2 = arith.constant 0 : index
    %c0_3 = arith.constant 0 : index
    %4 = vector.load %arg2[%c0_2, %c0_3] : memref<16x512xbf16, #tpu.memory_space<vmem>>, vector<16x512xbf16>
    %c0_4 = arith.constant 0 : index
    %c0_5 = arith.constant 0 : index
    %5 = vector.load %arg3[%c0_4, %c0_5] : memref<512x128xbf16, #tpu.memory_space<vmem>>, vector<512x128xbf16>
    %cst = arith.constant dense<0.000000e+00> : vector<16x128xf32>
    %6 = tpu.matmul %4, %5, %cst {dimension_numbers = #tpu.dot_dimension_numbers<[1], [0], [0], [1], [0, 0, 1, 1], [], []>} : vector<16x512xbf16>, vector<512x128xbf16>, vector<16x128xf32> -> vector<16x128xf32>
    %7 = arith.addf %3, %6 : vector<16x128xf32>
    %c0_6 = arith.constant 0 : index
    %c0_7 = arith.constant 0 : index
    %8 = vector.load %arg5[%c0_6, %c0_7] : memref<16x128xf32, #tpu.memory_space<vmem>>, vector<16x128xf32>
    tpu.vector_store %arg5[%c0_6, %c0_7], %7 {strides = array<i32>} : memref<16x128xf32, #tpu.memory_space<vmem>>, vector<16x128xf32>,
    %c1_i32 = arith.constant 1 : i32
    %9 = arith.cmpi eq, %arg1, %c1_i32 : i32
    %10 = arith.extui %9 : i1 to i32
    %c0_i32_8 = arith.constant 0 : i32
    %11 = arith.cmpi ne, %10, %c0_i32_8 : i32
    scf.if %11 {
      %c0_9 = arith.constant 0 : index
      %c0_10 = arith.constant 0 : index
      %12 = vector.load %arg5[%c0_9, %c0_10] : memref<16x128xf32, #tpu.memory_space<vmem>>, vector<16x128xf32>
      %c0_11 = arith.constant 0 : index
      %c0_12 = arith.constant 0 : index
      %13 = vector.load %arg4[%c0_11, %c0_12] : memref<16x128xf32, #tpu.memory_space<vmem>>, vector<16x128xf32>
      tpu.vector_store %arg4[%c0_11, %c0_12], %12 {strides = array<i32>} : memref<16x128xf32, #tpu.memory_space<vmem>>, vector<16x128xf32>,
    } else {
    }
    return
  }
  func.func @transform_0(%arg0: i32, %arg1: i32) -> (i32, i32) {
    %c0_i32 = arith.constant 0 : i32
    return %arg0, %arg1 : i32, i32
  }
  func.func @transform_1(%arg0: i32, %arg1: i32) -> (i32, i32) {
    %c0_i32 = arith.constant 0 : i32
    %c0_i32_0 = arith.constant 0 : i32
    return %arg1, %c0_i32 : i32, i32
  }
  func.func @transform_2(%arg0: i32, %arg1: i32) -> (i32, i32) {
    %c0_i32 = arith.constant 0 : i32
    %c0_i32_0 = arith.constant 0 : i32
    return %arg0, %c0_i32 : i32, i32
  }
}

</mosaic_0001>

<llo_original>
// kernel: tpu_custom_call.1
$region0: #{tpu_custom_call.1}
  #allocation0 [shape = 'u32[]', space=smem, size = 0x4, offset = 0x4, fixed_abs, tag = 'smem constant byte address 0x4 - core index']
  #allocation1 [shape = 'u32[72,128]{1,0:T(1,128)}', space=vmem, size = 0x9000, scoped, tag = 'internal scratch']
  #allocation2 [shape = 'f32[16,128]{1,0:T(8,128)}', space=vmem, size = 0x2000, scoped, tag = 'scratch operand']
  %s0 = inlined_call_operand.hbm [shape: bf16[16,1024], index: 0, kind: input, shape index: {}]
  %s1 = inlined_call_operand.hbm [shape: bf16[1024,128], index: 1, kind: input, shape index: {}]
  %s2 = inlined_call_operand.hbm [shape: f32[16,128], index: 2, kind: output, shape index: {}]
  %s3 = sld [smem:[#allocation0]]
  $region57: #{tpu_custom_call.1} parent=0
    _
  %s5 = ssub.s32 1, %s3
  %s6 = scalar_select 0, %s5, %s3
  $region1: #{tpu_custom_call.1} parent=0
    #allocation3 [shape = 'u8[32768]{0}', space=vmem, size = 0x8000, scoped, tag = 'input window, operand 0']
    #allocation4 [shape = 's32[2]{0}', space=sflag, size = 0x8, scoped, tag = 'scoped memory for tpu_custom_call.1']
    #allocation5 [shape = 's32[2]{0}', space=sflag, size = 0x8, scoped, tag = 'scoped memory for tpu_custom_call.1']
    #allocation6 [shape = 'u8[262144]{0}', space=vmem, size = 0x40000, scoped, tag = 'input window, operand 1']
    #allocation7 [shape = 's32[2]{0}', space=sflag, size = 0x8, scoped, tag = 'scoped memory for tpu_custom_call.1']
    #allocation8 [shape = 'u8[8192]{0}', space=vmem, size = 0x2000, scoped, tag = 'output window, operand 0, single buffered']
    %7 = vsyncpa [#allocation4], 0
    %s8 = scalar_lea.sflag [#allocation4], 1
    %9 = vsyncpa %s8, 0
    %10 = vsyncpa [#allocation7], 0
    %s11 = scalar_lea.sflag [#allocation7], 1
    %12 = vsyncpa %s11, 0
    %13 = vsyncpa [#allocation5], 0
    loop: start=0, step=1, limit=4
    $region2: #{tpu_custom_call.1} parent=1 // loop_pre_header
      _
    $region3: #{tpu_custom_call.1} parent=1 // loop_header
      %s15 = sphi 0, %s19
      %p16 = scmp.ge.s32.totalorder %s15, 4
      %s22 = sphi 0, %s34
      %s23 = sphi 0, %s30
      %s24 = sphi 0, %s22
      %s25 = sphi 0, %s23
      %s26 = sphi 0, %s24
      %s27 = sphi 0, %s25
      %s39 = sphi 0, %s41
      %s42 = sphi 0, %s39
      %s43 = sphi 0, %s42
      %s59 = sphi 0, %s43
      %s65 = sphi 0, %s67
      %s68 = sphi 0, %s65
      %s69 = sphi 0, %s68
      %s85 = sphi 0, %s69
      %s91 = sphi 0, %s93
      %s94 = sphi 0, %s91
      %s95 = sphi 0, %s94
      %s111 = sphi 0, %s95
    $region4: #{tpu_custom_call.1} parent=1 // loop_header_branch
      %18 = sbr.rel (%p16) target = $region8
    $region5: #{tpu_custom_call.1} parent=1 // loop_body
      %s20 = ssub.s32 %s15, 1
      %s21 = ssub.s32 %s15, 2
      %s28 = sadd.s32 1, %s23
      %p29 = scmp.ge.s32.totalorder %s28, 2
      %s30 = scalar_select %p29, 0, %s28
      %s31 = sadd.s32 1, %s22
      %s32 = scalar_select %p29, %s31, %s22
      %p33 = scmp.ge.s32.totalorder %s32, 1
      %s34 = scalar_select %p33, 0, %s32
      %s35 = ssub.s32 %s22, %s34
      %s36 = ssub.s32 %s23, %s30
      %s37 = sor.u32 %s35, %s36
      %p38 = scmp.eq.s32.totalorder %s37, 0
      %s40 = sadd.s32 %s39, 1
      %s41 = scalar_select %p38, %s39, %s40
      %p44 = pneg %p38
      %p45 = scmp.eq.s32.totalorder %s15, 1
      %p46 = por %p44, %p45
      %p47 = scmp.ne.s32.totalorder %s39, %s42
      %p48 = scmp.eq.s32.totalorder %s15, 0
      %p49 = por %p47, %p48
      %p50 = scmp.ne.s32.totalorder %s39, %s42
      %p51 = scmp.eq.s32.totalorder %s20, 1
      %p52 = por %p50, %p51
      %p53 = scmp.ne.s32.totalorder %s42, %s43
      %p54 = scmp.eq.s32.totalorder %s20, 0
      %p55 = por %p53, %p54
      %p56 = scmp.ne.s32.totalorder %s42, %s43
      %p57 = scmp.eq.s32.totalorder %s21, 1
      %p58 = por %p56, %p57
      %p60 = scmp.ne.s32.totalorder %s43, %s59
      %p61 = scmp.eq.s32.totalorder %s21, 0
      %p62 = por %p60, %p61
      %s63 = ssub.s32 %s23, %s30
      %p64 = scmp.eq.s32.totalorder %s63, 0
      %s66 = sadd.s32 %s65, 1
      %s67 = scalar_select %p64, %s65, %s66
      %p70 = pneg %p64
      %p71 = scmp.eq.s32.totalorder %s15, 1
      %p72 = por %p70, %p71
      %p73 = scmp.ne.s32.totalorder %s65, %s68
      %p74 = scmp.eq.s32.totalorder %s15, 0
      %p75 = por %p73, %p74
      %p76 = scmp.ne.s32.totalorder %s65, %s68
      %p77 = scmp.eq.s32.totalorder %s20, 1
      %p78 = por %p76, %p77
      %p79 = scmp.ne.s32.totalorder %s68, %s69
      %p80 = scmp.eq.s32.totalorder %s20, 0
      %p81 = por %p79, %p80
      %p82 = scmp.ne.s32.totalorder %s68, %s69
      %p83 = scmp.eq.s32.totalorder %s21, 1
      %p84 = por %p82, %p83
      %p86 = scmp.ne.s32.totalorder %s69, %s85
      %p87 = scmp.eq.s32.totalorder %s21, 0
      %p88 = por %p86, %p87
      %s89 = ssub.s32 %s22, %s34
      %p90 = scmp.eq.s32.totalorder %s89, 0
      %s92 = sadd.s32 %s91, 1
      %s93 = scalar_select %p90, %s91, %s92
      %p96 = pneg %p90
      %p97 = scmp.eq.s32.totalorder %s15, 1
      %p98 = por %p96, %p97
      %p99 = scmp.ne.s32.totalorder %s91, %s94
      %p100 = scmp.eq.s32.totalorder %s15, 0
      %p101 = por %p99, %p100
      %p102 = scmp.ne.s32.totalorder %s91, %s94
      %p103 = scmp.eq.s32.totalorder %s20, 1
      %p104 = por %p102, %p103
      %p105 = scmp.ne.s32.totalorder %s94, %s95
      %p106 = scmp.eq.s32.totalorder %s20, 0
      %p107 = por %p105, %p106
      %p108 = scmp.ne.s32.totalorder %s94, %s95
      %p109 = scmp.eq.s32.totalorder %s21, 1
      %p110 = por %p108, %p109
      %p112 = scmp.ne.s32.totalorder %s95, %s111
      %p113 = scmp.eq.s32.totalorder %s21, 0
      %p114 = por %p112, %p113
      %p115 = scmp.le.s32.totalorder 1, %s15
      %p116 = scmp.lt.s32.totalorder %s15, 3
      %p117 = pnand %p115, %p116
      %p118 = pneg %p117
      // Predicated region
      $region9: #{tpu_custom_call.1} parent=5 // pred_check
        _
      $region10: #{tpu_custom_call.1} parent=5 // pred_check_branch
        %120 = sbr.rel (%p117) target = $region12
      $region11: #{tpu_custom_call.1} parent=5 // pred_region
        %s121 = ssub.s32 %s15, 1
      $region12: #{tpu_custom_call.1} parent=5 // pred_fallthru
        _
      %p122 = scmp.lt.s32.totalorder %s15, 2
      // Predicated region
      $region13: #{tpu_custom_call.1} parent=5 // pred_check
        %p123 = pneg %p122
      $region14: #{tpu_custom_call.1} parent=5 // pred_check_branch
        %125 = sbr.rel (%p123) target = $region16
      $region15: #{tpu_custom_call.1} parent=5 // pred_region
        // Predicated region
        $region17: #{tpu_custom_call.1} parent=15 // pred_check
          %p126 = pneg %p49
        $region18: #{tpu_custom_call.1} parent=15 // pred_check_branch
          %128 = sbr.rel (%p126) target = $region20
        $region19: #{tpu_custom_call.1} parent=15 // pred_region
          %s129 = sand.u32 %s39, 1
          %s130 = scalar_lea.sflag [#allocation4], %s129
          %s131 = sand.u32 %s39, 1
          %s132 = smul.addr %s131, 32
          %s133 = scalar_lea.vmem [#allocation3], %s132
          %s134 = smul.u32 2, %s22
          %s135 = smul.u32 4, %s23
          %137 = vsyncadd %s130, 0
          %s138 = smul.addr %s134, 8
          %s139 = sadd.s32 %s135, %s138
          %s140 = smul.addr %s139, 4
          %s141 = scalar_lea.hbm %s0, %s140
          %s142 = sshll.u32 %s141, 4
          %s143 = int_to_ptr.hbm [resolvable:$true] %s142
          %s144 = sshll.u32 %s133, 4
          %s145 = int_to_ptr.vmem [resolvable:$true] %s144
          %150 = dma.hbm_to_vmem [thread:$0]  %s143, 512, %s145, %s130, 512, 256, 16
        $region20: #{tpu_custom_call.1} parent=15 // pred_fallthru
          _
        // Predicated region
        $region21: #{tpu_custom_call.1} parent=15 // pred_check
          %p151 = pneg %p75
        $region22: #{tpu_custom_call.1} parent=15 // pred_check_branch
          %153 = sbr.rel (%p151) target = $region24
        $region23: #{tpu_custom_call.1} parent=15 // pred_region
          %s154 = sand.u32 %s65, 1
          %s155 = scalar_lea.sflag [#allocation7], %s154
          %s156 = sand.u32 %s65, 1
          %s157 = smul.addr %s156, 256
          %s158 = scalar_lea.vmem [#allocation6], %s157
          %s159 = smul.u32 64, %s23
          %161 = vsyncadd %s155, 0
          %s162 = smul.addr %s159, 4
          %s163 = scalar_lea.hbm %s1, %s162
          %s164 = sshll.u32 %s163, 4
          %s165 = int_to_ptr.hbm [resolvable:$true] %s164
          %s166 = sshll.u32 %s158, 4
          %s167 = int_to_ptr.vmem [resolvable:$true] %s166
          %172 = dma.hbm_to_vmem [thread:$0]  %s165, 4096, %s167, %s155, 64, 64, 4
        $region24: #{tpu_custom_call.1} parent=15 // pred_fallthru
          _
      $region16: #{tpu_custom_call.1} parent=5 // pred_fallthru
        _
      %p173 = scmp.le.s32.totalorder 1, %s15
      %p174 = scmp.lt.s32.totalorder %s15, 3
      %p175 = pnand %p173, %p174
      %p176 = pneg %p175
      // Predicated region
      $region25: #{tpu_custom_call.1} parent=5 // pred_check
        _
      $region26: #{tpu_custom_call.1} parent=5 // pred_check_branch
        %178 = sbr.rel (%p175) target = $region28
      $region27: #{tpu_custom_call.1} parent=5 // pred_region
        %s179 = ssub.s32 %s15, 1
        %s180 = sand.u32 %s42, 1
        %s181 = scalar_lea.sflag [#allocation4], %s180
        %s182 = sand.u32 %s42, 1
        %s183 = smul.addr %s182, 32
        %s184 = scalar_lea.vmem [#allocation3], %s183
        // Predicated region
        $region29: #{tpu_custom_call.1} parent=27 // pred_check
          %p185 = pneg %p55
        $region30: #{tpu_custom_call.1} parent=27 // pred_check_branch
          %187 = sbr.rel (%p185) target = $region32
        $region31: #{tpu_custom_call.1} parent=27 // pred_region
          %189 = dma.done %s181, 512
        $region32: #{tpu_custom_call.1} parent=27 // pred_fallthru
          _
        %s190 = sand.u32 %s68, 1
        %s191 = scalar_lea.sflag [#allocation7], %s190
        %s192 = sand.u32 %s68, 1
        %s193 = smul.addr %s192, 256
        %s194 = scalar_lea.vmem [#allocation6], %s193
        // Predicated region
        $region33: #{tpu_custom_call.1} parent=27 // pred_check
          %p195 = pneg %p81
        $region34: #{tpu_custom_call.1} parent=27 // pred_check_branch
          %197 = sbr.rel (%p195) target = $region36
        $region35: #{tpu_custom_call.1} parent=27 // pred_region
          %199 = dma.done %s191, 4096
        $region36: #{tpu_custom_call.1} parent=27 // pred_fallthru
          _
        %s200 = sand.u32 %s42, 1
        %s201 = scalar_lea.sflag [#allocation4], %s200
        %s202 = sand.u32 %s42, 1
        %s203 = smul.addr %s202, 32
        %s204 = scalar_lea.vmem [#allocation3], %s203
        %p205 = pneg %p55
        %p206 = pneg %p52
        %s207 = sand.u32 %s68, 1
        %s208 = scalar_lea.sflag [#allocation7], %s207
        %s209 = sand.u32 %s68, 1
        %s210 = smul.addr %s209, 256
        %s211 = scalar_lea.vmem [#allocation6], %s210
        %p212 = pneg %p81
        %p213 = pneg %p78
        %p214 = pneg %p107
        %p215 = pneg %p104
        %s216 = smul.u32 2, %s24
        %s217 = smul.u32 4, %s25
        %s218 = smul.u32 64, %s25
        %s219 = smul.u32 2, %s24
        %p220 = scmp.eq.s32.totalorder %s25, 0
        // Predicated region
        $region37: #{tpu_custom_call.1} parent=27 // pred_check
          %p221 = pneg %p220
        $region38: #{tpu_custom_call.1} parent=27 // pred_check_branch
          %223 = sbr.rel (%p221) target = $region40
        $region39: #{tpu_custom_call.1} parent=27 // pred_region
          %224 = vst [vmem:[#allocation2] sm:$0xff] 0.0
          %225 = vst [vmem:[#allocation2 + $0x8] sm:$0xff] 0.0
        $region40: #{tpu_custom_call.1} parent=27 // pred_fallthru
          _
        %v226 = vld [vmem:[#allocation2] sm:$0xff]
        %v227 = vld [vmem:[#allocation2 + $0x8] sm:$0xff]
        %v228 = vld [vmem:[%s184] sm:$0xff]
        %v229 = vld [vmem:[%s184 + $0x8] sm:$0xff]
        %v230 = vld [vmem:[%s184 + $0x10] sm:$0xff]
        %v231 = vld [vmem:[%s184 + $0x18] sm:$0xff]
        %v232 = vld [vmem:[%s194] sm:$0xf]
        %v233 = vld [vmem:[%s194 + $0x4] sm:$0xf]
        %v234 = vld [vmem:[%s194 + $0x8] sm:$0xf]
        %v235 = vld [vmem:[%s194 + $0xc] sm:$0xf]
        %v236 = vld [vmem:[%s194 + $0x10] sm:$0xf]
        %v237 = vld [vmem:[%s194 + $0x14] sm:$0xf]
        %v238 = vld [vmem:[%s194 + $0x18] sm:$0xf]
        %v239 = vld [vmem:[%s194 + $0x1c] sm:$0xf]
        %v240 = vld [vmem:[%s194 + $0x20] sm:$0xf]
        %v241 = vld [vmem:[%s194 + $0x24] sm:$0xf]
        %v242 = vld [vmem:[%s194 + $0x28] sm:$0xf]
        %v243 = vld [vmem:[%s194 + $0x2c] sm:$0xf]
        %v244 = vld [vmem:[%s194 + $0x30] sm:$0xf]
        %v245 = vld [vmem:[%s194 + $0x34] sm:$0xf]
        %v246 = vld [vmem:[%s194 + $0x38] sm:$0xf]
        %v247 = vld [vmem:[%s194 + $0x3c] sm:$0xf]
        %v248 = vld [vmem:[%s194 + $0x40] sm:$0xf]
        %v249 = vld [vmem:[%s194 + $0x44] sm:$0xf]
        %v250 = vld [vmem:[%s194 + $0x48] sm:$0xf]
        %v251 = vld [vmem:[%s194 + $0x4c] sm:$0xf]
        %v252 = vld [vmem:[%s194 + $0x50] sm:$0xf]
        %v253 = vld [vmem:[%s194 + $0x54] sm:$0xf]
        %v254 = vld [vmem:[%s194 + $0x58] sm:$0xf]
        %v255 = vld [vmem:[%s194 + $0x5c] sm:$0xf]
        %v256 = vld [vmem:[%s194 + $0x60] sm:$0xf]
        %v257 = vld [vmem:[%s194 + $0x64] sm:$0xf]
        %v258 = vld [vmem:[%s194 + $0x68] sm:$0xf]
        %v259 = vld [vmem:[%s194 + $0x6c] sm:$0xf]
        %v260 = vld [vmem:[%s194 + $0x70] sm:$0xf]
        %v261 = vld [vmem:[%s194 + $0x74] sm:$0xf]
        %v262 = vld [vmem:[%s194 + $0x78] sm:$0xf]
        %v263 = vld [vmem:[%s194 + $0x7c] sm:$0xf]
        %v264 = vld [vmem:[%s194 + $0x80] sm:$0xf]
        %v265 = vld [vmem:[%s194 + $0x84] sm:$0xf]
        %v266 = vld [vmem:[%s194 + $0x88] sm:$0xf]
        %v267 = vld [vmem:[%s194 + $0x8c] sm:$0xf]
        %v268 = vld [vmem:[%s194 + $0x90] sm:$0xf]
        %v269 = vld [vmem:[%s194 + $0x94] sm:$0xf]
        %v270 = vld [vmem:[%s194 + $0x98] sm:$0xf]
        %v271 = vld [vmem:[%s194 + $0x9c] sm:$0xf]
        %v272 = vld [vmem:[%s194 + $0xa0] sm:$0xf]
        %v273 = vld [vmem:[%s194 + $0xa4] sm:$0xf]
        %v274 = vld [vmem:[%s194 + $0xa8] sm:$0xf]
        %v275 = vld [vmem:[%s194 + $0xac] sm:$0xf]
        %v276 = vld [vmem:[%s194 + $0xb0] sm:$0xf]
        %v277 = vld [vmem:[%s194 + $0xb4] sm:$0xf]
        %v278 = vld [vmem:[%s194 + $0xb8] sm:$0xf]
        %v279 = vld [vmem:[%s194 + $0xbc] sm:$0xf]
        %v280 = vld [vmem:[%s194 + $0xc0] sm:$0xf]
        %v281 = vld [vmem:[%s194 + $0xc4] sm:$0xf]
        %v282 = vld [vmem:[%s194 + $0xc8] sm:$0xf]
        %v283 = vld [vmem:[%s194 + $0xcc] sm:$0xf]
        %v284 = vld [vmem:[%s194 + $0xd0] sm:$0xf]
        %v285 = vld [vmem:[%s194 + $0xd4] sm:$0xf]
        %v286 = vld [vmem:[%s194 + $0xd8] sm:$0xf]
        %v287 = vld [vmem:[%s194 + $0xdc] sm:$0xf]
        %v288 = vld [vmem:[%s194 + $0xe0] sm:$0xf]
        %v289 = vld [vmem:[%s194 + $0xe4] sm:$0xf]
        %v290 = vld [vmem:[%s194 + $0xe8] sm:$0xf]
        %v291 = vld [vmem:[%s194 + $0xec] sm:$0xf]
        %v292 = vld [vmem:[%s194 + $0xf0] sm:$0xf]
        %v293 = vld [vmem:[%s194 + $0xf4] sm:$0xf]
        %v294 = vld [vmem:[%s194 + $0xf8] sm:$0xf]
        %v295 = vld [vmem:[%s194 + $0xfc] sm:$0xf]
        %v300 = vunpack.c.l.b16 %v228
        %v301 = vunpack.c.h.b16 %v228
        %v302 = vunpack.c.l.b16 %v229
        %v303 = vunpack.c.h.b16 %v229
        %v304 = vunpack.c.l.b16 %v230
        %v305 = vunpack.c.h.b16 %v230
        %v306 = vunpack.c.l.b16 %v231
        %v307 = vunpack.c.h.b16 %v231
        %v308 = vpack.c.b16 %v304, %v300
        %v309 = vpack.c.b16 %v305, %v301
        %v310 = vpack.c.b16 %v306, %v302
        %v311 = vpack.c.b16 %v307, %v303
        %v380 = vunpack.c.l.b16 %v232
        %v381 = vunpack.c.l.b16 %v233
        %v382 = vunpack.c.l.b16 %v234
        %v383 = vunpack.c.l.b16 %v235
        %v384 = vunpack.c.l.b16 %v236
        %v385 = vunpack.c.l.b16 %v237
        %v386 = vunpack.c.l.b16 %v238
        %v387 = vunpack.c.l.b16 %v239
        %v388 = vunpack.c.l.b16 %v240
        %v389 = vunpack.c.l.b16 %v241
        %v390 = vunpack.c.l.b16 %v242
        %v391 = vunpack.c.l.b16 %v243
        %v392 = vunpack.c.l.b16 %v244
        %v393 = vunpack.c.l.b16 %v245
        %v394 = vunpack.c.l.b16 %v246
        %v395 = vunpack.c.l.b16 %v247
        %v396 = vunpack.c.l.b16 %v248
        %v397 = vunpack.c.l.b16 %v249
        %v398 = vunpack.c.l.b16 %v250
        %v399 = vunpack.c.l.b16 %v251
        %v400 = vunpack.c.l.b16 %v252
        %v401 = vunpack.c.l.b16 %v253
        %v402 = vunpack.c.l.b16 %v254
        %v403 = vunpack.c.l.b16 %v255
        %v404 = vunpack.c.l.b16 %v256
        %v405 = vunpack.c.l.b16 %v257
        %v406 = vunpack.c.l.b16 %v258
        %v407 = vunpack.c.l.b16 %v259
        %v408 = vunpack.c.l.b16 %v260
        %v409 = vunpack.c.l.b16 %v261
        %v410 = vunpack.c.l.b16 %v262
        %v411 = vunpack.c.l.b16 %v263
        %v412 = vunpack.c.l.b16 %v264
        %v413 = vunpack.c.l.b16 %v265
        %v414 = vunpack.c.l.b16 %v266
        %v415 = vunpack.c.l.b16 %v267
        %v416 = vunpack.c.l.b16 %v268
        %v417 = vunpack.c.l.b16 %v269
        %v418 = vunpack.c.l.b16 %v270
        %v419 = vunpack.c.l.b16 %v271
        %v420 = vunpack.c.l.b16 %v272
        %v421 = vunpack.c.l.b16 %v273
        %v422 = vunpack.c.l.b16 %v274
        %v423 = vunpack.c.l.b16 %v275
        %v424 = vunpack.c.l.b16 %v276
        %v425 = vunpack.c.l.b16 %v277
        %v426 = vunpack.c.l.b16 %v278
        %v427 = vunpack.c.l.b16 %v279
        %v428 = vunpack.c.l.b16 %v280
        %v429 = vunpack.c.l.b16 %v281
        %v430 = vunpack.c.l.b16 %v282
        %v431 = vunpack.c.l.b16 %v283
        %v432 = vunpack.c.l.b16 %v284
        %v433 = vunpack.c.l.b16 %v285
        %v434 = vunpack.c.l.b16 %v286
        %v435 = vunpack.c.l.b16 %v287
        %v436 = vunpack.c.l.b16 %v288
        %v437 = vunpack.c.l.b16 %v289
        %v438 = vunpack.c.l.b16 %v290
        %v439 = vunpack.c.l.b16 %v291
        %v440 = vunpack.c.l.b16 %v292
        %v441 = vunpack.c.l.b16 %v293
        %v442 = vunpack.c.l.b16 %v294
        %v443 = vunpack.c.l.b16 %v295
        %v444 = vpack.c.b16 %v381, %v380
        %v445 = vpack.c.b16 %v383, %v382
        %v446 = vpack.c.b16 %v385, %v384
        %v447 = vpack.c.b16 %v387, %v386
        %v448 = vpack.c.b16 %v389, %v388
        %v449 = vpack.c.b16 %v391, %v390
        %v450 = vpack.c.b16 %v393, %v392
        %v451 = vpack.c.b16 %v395, %v394
        %v452 = vpack.c.b16 %v397, %v396
        %v453 = vpack.c.b16 %v399, %v398
        %v454 = vpack.c.b16 %v401, %v400
        %v455 = vpack.c.b16 %v403, %v402
        %v456 = vpack.c.b16 %v405, %v404
        %v457 = vpack.c.b16 %v407, %v406
        %v458 = vpack.c.b16 %v409, %v408
        %v459 = vpack.c.b16 %v411, %v410
        %v460 = vpack.c.b16 %v413, %v412
        %v461 = vpack.c.b16 %v415, %v414
        %v462 = vpack.c.b16 %v417, %v416
        %v463 = vpack.c.b16 %v419, %v418
        %v464 = vpack.c.b16 %v421, %v420
        %v465 = vpack.c.b16 %v423, %v422
        %v466 = vpack.c.b16 %v425, %v424
        %v467 = vpack.c.b16 %v427, %v426
        %v468 = vpack.c.b16 %v429, %v428
        %v469 = vpack.c.b16 %v431, %v430
        %v470 = vpack.c.b16 %v433, %v432
        %v471 = vpack.c.b16 %v435, %v434
        %v472 = vpack.c.b16 %v437, %v436
        %v473 = vpack.c.b16 %v439, %v438
        %v474 = vpack.c.b16 %v441, %v440
        %v475 = vpack.c.b16 %v443, %v442
        %508 = vmatpush.bf16.msra.mxu0 %v451
        %509 = vmatpush.bf16.msra.mxu0 %v450
        %510 = vmatpush.bf16.msra.mxu0 %v449
        %511 = vmatpush.bf16.msra.mxu0 %v448
        %512 = vmatpush.bf16.msra.mxu0 %v447
        %513 = vmatpush.bf16.msra.mxu0 %v446
        %514 = vmatpush.bf16.msra.mxu0 %v445
        %515 = vmatpush.bf16.msra.mxu0 %v444
        %516 = vmatmul.bf16.gmra.mxu0 %v308
        %v517 = vpop.f32.mrf.mxu0
        %v518 = vadd.f32 0.0, %v517
        %v519 = vpop.f32.mrf.mxu0
        %v520 = vadd.f32 0.0, %v519
        %521 = vdwg.mxu0
        %522 = vmatpush.bf16.msra.mxu0 %v459
        %523 = vmatpush.bf16.msra.mxu0 %v458
        %524 = vmatpush.bf16.msra.mxu0 %v457
        %525 = vmatpush.bf16.msra.mxu0 %v456
        %526 = vmatpush.bf16.msra.mxu0 %v455
        %527 = vmatpush.bf16.msra.mxu0 %v454
        %528 = vmatpush.bf16.msra.mxu0 %v453
        %529 = vmatpush.bf16.msra.mxu0 %v452
        %530 = vmatmul.bf16.gmra.mxu0 %v309
        %v531 = vpop.f32.mrf.mxu0
        %v532 = vadd.f32 %v518, %v531
        %v533 = vpop.f32.mrf.mxu0
        %v534 = vadd.f32 %v520, %v533
        %535 = vdwg.mxu0
        %536 = vmatpush.bf16.msra.mxu0 %v467
        %537 = vmatpush.bf16.msra.mxu0 %v466
        %538 = vmatpush.bf16.msra.mxu0 %v465
        %539 = vmatpush.bf16.msra.mxu0 %v464
        %540 = vmatpush.bf16.msra.mxu0 %v463
        %541 = vmatpush.bf16.msra.mxu0 %v462
        %542 = vmatpush.bf16.msra.mxu0 %v461
        %543 = vmatpush.bf16.msra.mxu0 %v460
        %544 = vmatmul.bf16.gmra.mxu0 %v310
        %v545 = vpop.f32.mrf.mxu0
        %v546 = vadd.f32 %v532, %v545
        %v547 = vpop.f32.mrf.mxu0
        %v548 = vadd.f32 %v534, %v547
        %549 = vdwg.mxu0
        %550 = vmatpush.bf16.msra.mxu0 %v475
        %551 = vmatpush.bf16.msra.mxu0 %v474
        %552 = vmatpush.bf16.msra.mxu0 %v473
        %553 = vmatpush.bf16.msra.mxu0 %v472
        %554 = vmatpush.bf16.msra.mxu0 %v471
        %555 = vmatpush.bf16.msra.mxu0 %v470
        %556 = vmatpush.bf16.msra.mxu0 %v469
        %557 = vmatpush.bf16.msra.mxu0 %v468
        %558 = vmatmul.bf16.gmra.mxu0 %v311
        %v559 = vpop.f32.mrf.mxu0
        %v560 = vadd.f32 %v546, %v559
        %v561 = vpop.f32.mrf.mxu0
        %v562 = vadd.f32 %v548, %v561
        %563 = vdwg.mxu0
        %v564 = vadd.f32 %v226, %v560
        %v565 = vadd.f32 %v227, %v562
        %566 = vst [vmem:[#allocation2] sm:$0xff] %v564
        %567 = vst [vmem:[#allocation2 + $0x8] sm:$0xff] %v565
        %p568 = scmp.eq.s32.totalorder %s25, 1
        // Predicated region
        $region41: #{tpu_custom_call.1} parent=27 // pred_check
          %p569 = pneg %p568
        $region42: #{tpu_custom_call.1} parent=27 // pred_check_branch
          %571 = sbr.rel (%p569) target = $region44
        $region43: #{tpu_custom_call.1} parent=27 // pred_region
          %v572 = vld [vmem:[#allocation2] sm:$0xff]
          %v573 = vld [vmem:[#allocation2 + $0x8] sm:$0xff]
          %574 = vst [vmem:[#allocation8] sm:$0xff] %v572
          %575 = vst [vmem:[#allocation8 + $0x8] sm:$0xff] %v573
        $region44: #{tpu_custom_call.1} parent=27 // pred_fallthru
          _
        // Predicated region
        $region45: #{tpu_custom_call.1} parent=27 // pred_check
          %p576 = pneg %p104
        $region46: #{tpu_custom_call.1} parent=27 // pred_check_branch
          %578 = sbr.rel (%p576) target = $region48
        $region47: #{tpu_custom_call.1} parent=27 // pred_region
          %s579 = smul.u32 2, %s24
          %581 = vsyncadd [#allocation5], 0
          %s582 = smul.addr %s579, 8
          %s583 = scalar_lea.hbm %s2, %s582
          %s584 = sshll.u32 [#allocation8], 4
          %s585 = int_to_ptr.vmem [resolvable:$true] %s584
          %s586 = sshll.u32 %s583, 4
          %s587 = int_to_ptr.hbm [resolvable:$true] %s586
          %592 = dma.vmem_to_hbm [thread:$0]  %s585, 256, %s587, [#allocation5], 128, 128, 8
        $region48: #{tpu_custom_call.1} parent=27 // pred_fallthru
          _
        // Predicated region
        $region49: #{tpu_custom_call.1} parent=27 // pred_check
          %p593 = pneg %p104
        $region50: #{tpu_custom_call.1} parent=27 // pred_check_branch
          %595 = sbr.rel (%p593) target = $region52
        $region51: #{tpu_custom_call.1} parent=27 // pred_region
          %597 = dma.done [#allocation5], 256
        $region52: #{tpu_custom_call.1} parent=27 // pred_fallthru
          _
      $region28: #{tpu_custom_call.1} parent=5 // pred_fallthru
        _
      %p598 = scmp.le.s32.totalorder 2, %s15
      // Predicated region
      $region53: #{tpu_custom_call.1} parent=5 // pred_check
        %p599 = pneg %p598
      $region54: #{tpu_custom_call.1} parent=5 // pred_check_branch
        %601 = sbr.rel (%p599) target = $region56
      $region55: #{tpu_custom_call.1} parent=5 // pred_region
        %s602 = ssub.s32 %s15, 2
      $region56: #{tpu_custom_call.1} parent=5 // pred_fallthru
        _
    $region6: #{tpu_custom_call.1} parent=1 // loop_footer
      %s19 = sadd.s32 1, %s15
    $region7: #{tpu_custom_call.1} parent=1 // loop_footer_branch
      %14 = sbr.rel target = $region3
    $region8: #{tpu_custom_call.1} parent=1 // loop_exit
      _
    %603 = vsyncpa [#allocation4], 1
    %s604 = scalar_lea.sflag [#allocation4], 1
    %605 = vsyncpa %s604, 1
    %606 = vsyncpa [#allocation7], 1
    %s607 = scalar_lea.sflag [#allocation7], 1
    %608 = vsyncpa %s607, 1
    %609 = vsyncpa [#allocation5], 1
    %s610 = scalar_lea.sflag [#allocation5], 1
    %611 = vsyncpa %s610, 1

</llo_original>
